<compile_context>
chip_gen: v6e
topology: v6e:2x2x1
jax: 0.10.0
libtpu: 0.0.40
codegen_flags: <defaults>
</compile_context>

<pallas_src>
import jax
import jax.numpy as jnp
from jax import lax
from jax.experimental import pallas as pl
from jax.experimental.pallas import tpu as pltpu


def _make_weighted_loss_kernel(wc0, wc1, wc2, wc3, tb_rows, n_rows):
    """wc0..wc3: per-class normalized weights; tb_rows: rows per block;
    n_rows: number of valid rows in the (R, 128) input slab."""

    def kernel(x_ref, oh_ref, out_ref, acc_nl, acc_w):
        o = pl.program_id(0)                 # outer ("parallel") axis
        i = pl.program_id(1)                 # inner ("arbitrary") reduction axis
        n_inner = pl.num_programs(1)

        @pl.when(i == 0)
        def _init():
            acc_nl[...] = jnp.zeros_like(acc_nl)
            acc_w[...] = jnp.zeros_like(acc_w)

        # Native-dtype DMA, f32 math in-kernel.
        x = x_ref[...].astype(jnp.float32)                 # (tb, 128)
        shape = x.shape

        lane = lax.broadcasted_iota(jnp.int32, shape, 1)   # 0..127 per lane
        lm4 = lane & 3                                     # class id of this lane

        # Direction-agnostic butterfly masks: roll an iota and check which
        # neighbour each roll actually fetches (robust to roll sign convention).
        r1 = pltpu.roll(lane, shift=1, axis=1)
        r2 = pltpu.roll(lane, shift=2, axis=1)
        use_r1 = r1 == (lane ^ 1)    # roll-by-1 fetches the XOR-1 partner here
        use_r2 = r2 == (lane ^ 2)    # roll-by-2 fetches the XOR-2 partner here

        def group4_allreduce(vals, op):
            # Reduce over each aligned group of 4 lanes, result broadcast to
            # all 4 lanes of the group.  2 butterfly stages, 4 XLU rolls.
            p1 = jnp.where(use_r1,
                           pltpu.roll(vals, shift=1, axis=1),
                           pltpu.roll(vals, shift=127, axis=1))
            v1 = op(vals, p1)
            p2 = jnp.where(use_r2,
                           pltpu.roll(v1, shift=2, axis=1),
                           pltpu.roll(v1, shift=126, axis=1))
            return op(v1, p2)

        # Stable per-sample log-sum-exp over the 4 interleaved class lanes.
        mx = group4_allreduce(x, jnp.maximum)              # per-sample max
        e = jnp.exp(x - mx)
        se = group4_allreduce(e, lambda a, b: a + b)       # per-sample sum(exp)
        lse = jnp.log(se) + mx
        neg_logpt = lse - x          # at lane with class == target: lse_i - x_i[t_i]

        # One-hot gather mask (built in the wrapper, same layout as x).
        match = oh_ref[...] != 0

        # Per-lane class weight pattern wclass[lane % 4] (already normalized).
        wl = jnp.where(lm4 == 0, wc0,
             jnp.where(lm4 == 1, wc1,
             jnp.where(lm4 == 2, wc2, wc3)))

        c_nl = jnp.where(match, neg_logpt, 0.0)            # contributes -logpt_i
        c_w = jnp.where(match, wl, 0.0)                    # contributes w_i

        # Row-validity mask only on blocks that can be ragged / fully OOB.
        b = o * n_inner + i                                # unclamped block index
        ragged = (b + 1) * tb_rows > n_rows

        @pl.when(jnp.logical_not(ragged))
        def _acc_fast():
            acc_nl[...] += c_nl
            acc_w[...] += c_w

        @pl.when(ragged)
        def _acc_masked():
            row = lax.broadcasted_iota(jnp.int32, shape, 0)
            valid = (b * tb_rows + row) < n_rows
            # select (not multiply) so garbage Inf/NaN in OOB rows is discarded.
            acc_nl[...] += jnp.where(valid, c_nl, 0.0)
            acc_w[...] += jnp.where(valid, c_w, 0.0)

        @pl.when(i == n_inner - 1)
        def _finalize():
            # Single cross-sublane reduction per outer index; lane reduction and
            # the (sum_w * sum_neg_logpt) / B^2 combine happen in the wrapper.
            out_ref[0, 0] = jnp.sum(acc_nl[...], axis=0, keepdims=True)
            out_ref[0, 1] = jnp.sum(acc_w[...], axis=0, keepdims=True)

    return kernel


def weighted_loss(x, target, *, n, v, s, f, tile_rows=2048, n_outer=2):
    """x: (B, 4) float (f32 or bf16) logits, target: (B,)/(B,1) labels in {0..3}."""
    B, C = x.shape
    if C != 4:
        # TODO(synk): only the 4-class (N, V, S, F) fast path is implemented.
        raise ValueError("weighted_loss kernel supports exactly 4 classes")
    if tile_rows % 32 != 0 or tile_rows < 32:
        raise ValueError("tile_rows must be a positive multiple of 32")

    inv_n, inv_v, inv_s, inv_f = 1.0 / n, 1.0 / v, 1.0 / s, 1.0 / f
    inv_sum = 1.0 / (inv_n + inv_s + inv_v + inv_f)
    wc = (inv_n * inv_sum, inv_v * inv_sum, inv_s * inv_sum, inv_f * inv_sum)

    # Lane-dense interleaved view: flat row-major (B, 4) -> (R, 128).
    total = B * C
    R = pl.cdiv(total, 128)
    pad = R * 128 - total

    x_flat = x.reshape(-1)                                  # free (row-major)
    t = target.reshape(-1).astype(jnp.int32)
    onehot = (t[:, None] == jnp.arange(4, dtype=jnp.int32)[None, :]) \
        .astype(jnp.int8).reshape(-1)                        # (4B,) gather mask

    if pad:
        # TODO(synk): this flat pad is one copy pass over x; it is skipped
        # entirely (zero-copy reshape) whenever B % 32 == 0.
        x_flat = jnp.pad(x_flat, (0, pad))
        onehot = jnp.pad(onehot, (0, pad))

    x2 = x_flat.reshape(R, 128)
    m2 = onehot.reshape(R, 128)

    # Tiling: full-array block for small inputs, tile_rows otherwise.
    tb = R if R <= tile_rows else tile_rows
    NB = pl.cdiv(R, tb)                                      # number of row-blocks
    n_out = max(1, min(n_outer, NB))                         # TC split (v7x: 2)
    n_inner = pl.cdiv(NB, n_out)

    def x_index_map(o, i):
        # Clamp so the DMA never starts past the array; fully-OOB grid steps
        # re-read the last block and are discarded by the in-kernel mask.
        return (jnp.minimum(o * n_inner + i, NB - 1), 0)

    kernel = _make_weighted_loss_kernel(wc[0], wc[1], wc[2], wc[3], tb, R)

    out = pl.pallas_call(
        kernel,
        out_shape=jax.ShapeDtypeStruct((n_out, 2, 1, 128), jnp.float32),
        grid_spec=pltpu.PrefetchScalarGridSpec(
            num_scalar_prefetch=0,
            grid=(n_out, n_inner),
            in_specs=[
                pl.BlockSpec((tb, 128), x_index_map),        # logits (native dtype)
                pl.BlockSpec((tb, 128), x_index_map),        # int8 one-hot mask
            ],
            out_specs=pl.BlockSpec((1, 2, 1, 128), lambda o, i: (o, 0, 0, 0)),
            scratch_shapes=[
                pltpu.VMEM((tb, 128), jnp.float32),          # acc: sum(-logpt)
                pltpu.VMEM((tb, 128), jnp.float32),          # acc: sum(w)
            ],
        ),
        compiler_params=pltpu.CompilerParams(
            dimension_semantics=("parallel", "arbitrary"),
            vmem_limit_bytes=32 * 1024 * 1024,
        ),
    )(x2, m2)

    sum_neg_logpt = jnp.sum(out[:, 0])
    sum_w = jnp.sum(out[:, 1])
    # PyTorch quirk: (-w[(B,1)] * logpt[(B,)]).mean() averages the (B, B)
    # broadcast == (sum_w * sum_neg_logpt) / B^2.
    return sum_w * sum_neg_logpt / float(B * B)


def _reference(x, target, *, n, v, s, f):
    """Pure-JAX reference mirroring the PyTorch code (incl. broadcast quirk)."""
    x = x.astype(jnp.float32)
    t = target.reshape(-1, 1).astype(jnp.int32)
    logpt = jax.nn.log_softmax(x, axis=1)
    logpt_g = jnp.take_along_axis(logpt, t, axis=1).reshape(-1)      # (B,)
    w = (jnp.where(t == 0, 1.0 / n, 0.0) + jnp.where(t == 1, 1.0 / v, 0.0)
         + jnp.where(t == 2, 1.0 / s, 0.0) + jnp.where(t == 3, 1.0 / f, 0.0))
    w = w / (1.0 / n + 1.0 / s + 1.0 / v + 1.0 / f)                  # (B, 1)
    loss = -1.0 * w * logpt_g                                        # (B, B)
    return loss.mean()


if __name__ == "__main__":
    key = jax.random.PRNGKey(0)
    num_n, num_v, num_s, num_f = 90, 5, 3, 2        # deterministic class counts

    cases = [
        # (B, dtype, tile_rows, description)
        (8,    jnp.float32,  2048, "single tiny full-array block"),
        (8,    jnp.bfloat16, 2048, "bf16 input, native-dtype DMA"),
        (2048, jnp.float32,  32,   "two outer blocks, even split, fast path"),
        (3072, jnp.float32,  32,   "clamped fully-OOB grid step"),
        (300,  jnp.float32,  2048, "flat pad path (B % 32 != 0)"),
        (1100, jnp.bfloat16, 32,   "ragged final block + pad"),
    ]

    for B, dtype, tile_rows, desc in cases:
        key, kx, kt = jax.random.split(key, 3)
        x = jax.random.normal(kx, (B, 4), dtype=jnp.float32).astype(dtype)
        t = jax.random.randint(kt, (B,), 0, 4, dtype=jnp.int32)

        out = jax.block_until_ready(
            weighted_loss(x, t, n=num_n, v=num_v, s=num_s, f=num_f,
                          tile_rows=tile_rows))
        ref = _reference(x, t, n=num_n, v=num_v, s=num_s, f=num_f)
        assert jnp.allclose(out, ref, rtol=5e-4, atol=1e-5), (desc, out, ref)

    print("KERNEL_OK")
</pallas_src>

<mosaic_0001>
module attributes {stable_mosaic.version = 11 : i64} {
  func.func @kernel(%arg0: i32, %arg1: i32, %arg2: memref<1x128xf32, #tpu.memory_space<vmem>>, %arg3: memref<1x128xi8, #tpu.memory_space<vmem>>, %arg4: memref<1x2x1x128xf32, #tpu.memory_space<vmem>>, %arg5: memref<1x128xf32, #tpu.memory_space<vmem>>, %arg6: memref<1x128xf32, #tpu.memory_space<vmem>>) attributes {dimension_semantics = [#tpu.dimension_semantics<parallel>, #tpu.dimension_semantics<arbitrary>], iteration_bounds = array<i64: 1, 1>, scalar_prefetch = 0 : i64, scratch_operands = 2 : i64, tpu.core_type = #tpu.core_type<tc>, window_params = [{transform_indices = @transform_0, window_bounds = array<i64: 1, 128>}, {transform_indices = @transform_1, window_bounds = array<i64: 1, 128>}, {transform_indices = @transform_2, window_bounds = array<i64: 1, 2, 1, 128>}]} {
    %c0_i32 = arith.constant 0 : i32
    %0 = arith.cmpi eq, %arg1, %c0_i32 : i32
    %1 = arith.extui %0 : i1 to i32
    %c0_i32_0 = arith.constant 0 : i32
    %2 = arith.cmpi ne, %1, %c0_i32_0 : i32
    scf.if %2 {
      %cst_28 = arith.constant 0.000000e+00 : f32
      %69 = vector.broadcast %cst_28 : f32 to vector<1x128xf32>
      %c0_29 = arith.constant 0 : index
      %c0_30 = arith.constant 0 : index
      %70 = vector.load %arg5[%c0_29, %c0_30] : memref<1x128xf32, #tpu.memory_space<vmem>>, vector<1x128xf32>
      tpu.vector_store %arg5[%c0_29, %c0_30], %69 {strides = array<i32>} : memref<1x128xf32, #tpu.memory_space<vmem>>, vector<1x128xf32>,
      %cst_31 = arith.constant 0.000000e+00 : f32
      %71 = vector.broadcast %cst_31 : f32 to vector<1x128xf32>
      %c0_32 = arith.constant 0 : index
      %c0_33 = arith.constant 0 : index
      %72 = vector.load %arg6[%c0_32, %c0_33] : memref<1x128xf32, #tpu.memory_space<vmem>>, vector<1x128xf32>
      tpu.vector_store %arg6[%c0_32, %c0_33], %71 {strides = array<i32>} : memref<1x128xf32, #tpu.memory_space<vmem>>, vector<1x128xf32>,
    } else {
    }
    %c0 = arith.constant 0 : index
    %c0_1 = arith.constant 0 : index
    %3 = vector.load %arg2[%c0, %c0_1] : memref<1x128xf32, #tpu.memory_space<vmem>>, vector<1x128xf32>
    %4 = tpu.iota {dimensions = array<i32: 1>} : vector<1x128xi32>
    %c3_i32 = arith.constant 3 : i32
    %5 = vector.broadcast %c3_i32 : i32 to vector<1x128xi32>
    %6 = arith.andi %4, %5 : vector<1x128xi32>
    %c1_i32 = arith.constant 1 : i32
    %7 = tpu.dynamic_rotate %4 by %c1_i32 dim 1 : vector<1x128xi32>, i32 -> vector<1x128xi32>
    %c2_i32 = arith.constant 2 : i32
    %8 = tpu.dynamic_rotate %4 by %c2_i32 dim 1 : vector<1x128xi32>, i32 -> vector<1x128xi32>
    %c1_i32_2 = arith.constant 1 : i32
    %9 = vector.broadcast %c1_i32_2 : i32 to vector<1x128xi32>
    %10 = arith.xori %4, %9 : vector<1x128xi32>
    %11 = arith.cmpi eq, %7, %10 : vector<1x128xi32>
    %c2_i32_3 = arith.constant 2 : i32
    %12 = vector.broadcast %c2_i32_3 : i32 to vector<1x128xi32>
    %13 = arith.xori %4, %12 : vector<1x128xi32>
    %14 = arith.cmpi eq, %8, %13 : vector<1x128xi32>
    %c1_i32_4 = arith.constant 1 : i32
    %15 = tpu.dynamic_rotate %3 by %c1_i32_4 dim 1 : vector<1x128xf32>, i32 -> vector<1x128xf32>
    %c127_i32 = arith.constant 127 : i32
    %16 = tpu.dynamic_rotate %3 by %c127_i32 dim 1 : vector<1x128xf32>, i32 -> vector<1x128xf32>
    %17 = arith.select %11, %15, %16 : vector<1x128xi1>, vector<1x128xf32>
    %18 = arith.maximumf %3, %17 : vector<1x128xf32>
    %c2_i32_5 = arith.constant 2 : i32
    %19 = tpu.dynamic_rotate %18 by %c2_i32_5 dim 1 : vector<1x128xf32>, i32 -> vector<1x128xf32>
    %c126_i32 = arith.constant 126 : i32
    %20 = tpu.dynamic_rotate %18 by %c126_i32 dim 1 : vector<1x128xf32>, i32 -> vector<1x128xf32>
    %21 = arith.select %14, %19, %20 : vector<1x128xi1>, vector<1x128xf32>
    %22 = arith.maximumf %18, %21 : vector<1x128xf32>
    %23 = arith.subf %3, %22 : vector<1x128xf32>
    %24 = math.exp %23 : vector<1x128xf32>
    %c1_i32_6 = arith.constant 1 : i32
    %25 = tpu.dynamic_rotate %24 by %c1_i32_6 dim 1 : vector<1x128xf32>, i32 -> vector<1x128xf32>
    %c127_i32_7 = arith.constant 127 : i32
    %26 = tpu.dynamic_rotate %24 by %c127_i32_7 dim 1 : vector<1x128xf32>, i32 -> vector<1x128xf32>
    %27 = arith.select %11, %25, %26 : vector<1x128xi1>, vector<1x128xf32>
    %28 = arith.addf %24, %27 : vector<1x128xf32>
    %c2_i32_8 = arith.constant 2 : i32
    %29 = tpu.dynamic_rotate %28 by %c2_i32_8 dim 1 : vector<1x128xf32>, i32 -> vector<1x128xf32>
    %c126_i32_9 = arith.constant 126 : i32
    %30 = tpu.dynamic_rotate %28 by %c126_i32_9 dim 1 : vector<1x128xf32>, i32 -> vector<1x128xf32>
    %31 = arith.select %14, %29, %30 : vector<1x128xi1>, vector<1x128xf32>
    %32 = arith.addf %28, %31 : vector<1x128xf32>
    %33 = math.log %32 : vector<1x128xf32>
    %34 = arith.addf %33, %22 : vector<1x128xf32>
    %35 = arith.subf %34, %3 : vector<1x128xf32>
    %c0_10 = arith.constant 0 : index
    %c0_11 = arith.constant 0 : index
    %36 = vector.load %arg3[%c0_10, %c0_11] : memref<1x128xi8, #tpu.memory_space<vmem>>, vector<1x128xi8>
    %c0_i8 = arith.constant 0 : i8
    %37 = vector.broadcast %c0_i8 : i8 to vector<1x128xi8>
    %38 = arith.cmpi ne, %36, %37 : vector<1x128xi8>
    %c0_i32_12 = arith.constant 0 : i32
    %39 = vector.broadcast %c0_i32_12 : i32 to vector<1x128xi32>
    %40 = arith.cmpi eq, %6, %39 : vector<1x128xi32>
    %c1_i32_13 = arith.constant 1 : i32
    %41 = vector.broadcast %c1_i32_13 : i32 to vector<1x128xi32>
    %42 = arith.cmpi eq, %6, %41 : vector<1x128xi32>
    %c2_i32_14 = arith.constant 2 : i32
    %43 = vector.broadcast %c2_i32_14 : i32 to vector<1x128xi32>
    %44 = arith.cmpi eq, %6, %43 : vector<1x128xi32>
    %cst = arith.constant 0.319148928 : f32
    %cst_15 = arith.constant 0.478723407 : f32
    %45 = vector.broadcast %cst : f32 to vector<1x128xf32>
    %46 = vector.broadcast %cst_15 : f32 to vector<1x128xf32>
    %47 = arith.select %44, %45, %46 : vector<1x128xi1>, vector<1x128xf32>
    %cst_16 = arith.constant 0.191489369 : f32
    %48 = vector.broadcast %cst_16 : f32 to vector<1x128xf32>
    %49 = arith.select %42, %48, %47 : vector<1x128xi1>, vector<1x128xf32>
    %cst_17 = arith.constant 0.0106382975 : f32
    %50 = vector.broadcast %cst_17 : f32 to vector<1x128xf32>
    %51 = arith.select %40, %50, %49 : vector<1x128xi1>, vector<1x128xf32>
    %cst_18 = arith.constant 0.000000e+00 : f32
    %52 = vector.broadcast %cst_18 : f32 to vector<1x128xf32>
    %53 = arith.select %38, %35, %52 : vector<1x128xi1>, vector<1x128xf32>
    %cst_19 = arith.constant 0.000000e+00 : f32
    %54 = vector.broadcast %cst_19 : f32 to vector<1x128xf32>
    %55 = arith.select %38, %51, %54 : vector<1x128xi1>, vector<1x128xf32>
    %c1_i32_20 = arith.constant 1 : i32
    %56 = arith.muli %arg0, %c1_i32_20 : i32
    %57 = arith.addi %56, %arg1 : i32
    %c1_i32_21 = arith.constant 1 : i32
    %58 = arith.addi %57, %c1_i32_21 : i32
    %c1_i32_22 = arith.constant 1 : i32
    %59 = arith.muli %58, %c1_i32_22 : i32
    %c1_i32_23 = arith.constant 1 : i32
    %60 = arith.cmpi sgt, %59, %c1_i32_23 : i32
    %true = arith.constant true
    %61 = arith.xori %60, %true : i1
    %62 = arith.extui %61 : i1 to i32
    %c0_i32_24 = arith.constant 0 : i32
    %63 = arith.cmpi ne, %62, %c0_i32_24 : i32
    scf.if %63 {
      %c0_28 = arith.constant 0 : index
      %c0_29 = arith.constant 0 : index
      %69 = vector.load %arg5[%c0_28, %c0_29] : memref<1x128xf32, #tpu.memory_space<vmem>>, vector<1x128xf32>
      %70 = arith.addf %69, %53 : vector<1x128xf32>
      %c0_30 = arith.constant 0 : index
      %c0_31 = arith.constant 0 : index
      %71 = vector.load %arg5[%c0_30, %c0_31] : memref<1x128xf32, #tpu.memory_space<vmem>>, vector<1x128xf32>
      tpu.vector_store %arg5[%c0_30, %c0_31], %70 {strides = array<i32>} : memref<1x128xf32, #tpu.memory_space<vmem>>, vector<1x128xf32>,
      %c0_32 = arith.constant 0 : index
      %c0_33 = arith.constant 0 : index
      %72 = vector.load %arg6[%c0_32, %c0_33] : memref<1x128xf32, #tpu.memory_space<vmem>>, vector<1x128xf32>
      %73 = arith.addf %72, %55 : vector<1x128xf32>
      %c0_34 = arith.constant 0 : index
      %c0_35 = arith.constant 0 : index
      %74 = vector.load %arg6[%c0_34, %c0_35] : memref<1x128xf32, #tpu.memory_space<vmem>>, vector<1x128xf32>
      tpu.vector_store %arg6[%c0_34, %c0_35], %73 {strides = array<i32>} : memref<1x128xf32, #tpu.memory_space<vmem>>, vector<1x128xf32>,
    } else {
    }
    %64 = arith.extui %60 : i1 to i32
    %c0_i32_25 = arith.constant 0 : i32
    %65 = arith.cmpi ne, %64, %c0_i32_25 : i32
    scf.if %65 {
      %69 = tpu.iota {dimensions = array<i32: 0>} : vector<1x128xi32>
      %c1_i32_28 = arith.constant 1 : i32
      %70 = arith.muli %57, %c1_i32_28 : i32
      %71 = vector.broadcast %70 : i32 to vector<1x128xi32>
      %72 = arith.addi %71, %69 : vector<1x128xi32>
      %c1_i32_29 = arith.constant 1 : i32
      %73 = vector.broadcast %c1_i32_29 : i32 to vector<1x128xi32>
      %74 = arith.cmpi slt, %72, %73 : vector<1x128xi32>
      %c0_30 = arith.constant 0 : index
      %c0_31 = arith.constant 0 : index
      %75 = vector.load %arg5[%c0_30, %c0_31] : memref<1x128xf32, #tpu.memory_space<vmem>>, vector<1x128xf32>
      %cst_32 = arith.constant 0.000000e+00 : f32
      %76 = vector.broadcast %cst_32 : f32 to vector<1x128xf32>
      %77 = arith.select %74, %53, %76 : vector<1x128xi1>, vector<1x128xf32>
      %78 = arith.addf %75, %77 : vector<1x128xf32>
      %c0_33 = arith.constant 0 : index
      %c0_34 = arith.constant 0 : index
      %79 = vector.load %arg5[%c0_33, %c0_34] : memref<1x128xf32, #tpu.memory_space<vmem>>, vector<1x128xf32>
      tpu.vector_store %arg5[%c0_33, %c0_34], %78 {strides = array<i32>} : memref<1x128xf32, #tpu.memory_space<vmem>>, vector<1x128xf32>,
      %c0_35 = arith.constant 0 : index
      %c0_36 = arith.constant 0 : index
      %80 = vector.load %arg6[%c0_35, %c0_36] : memref<1x128xf32, #tpu.memory_space<vmem>>, vector<1x128xf32>
      %cst_37 = arith.constant 0.000000e+00 : f32
      %81 = vector.broadcast %cst_37 : f32 to vector<1x128xf32>
      %82 = arith.select %74, %55, %81 : vector<1x128xi1>, vector<1x128xf32>
      %83 = arith.addf %80, %82 : vector<1x128xf32>
      %c0_38 = arith.constant 0 : index
      %c0_39 = arith.constant 0 : index
      %84 = vector.load %arg6[%c0_38, %c0_39] : memref<1x128xf32, #tpu.memory_space<vmem>>, vector<1x128xf32>
      tpu.vector_store %arg6[%c0_38, %c0_39], %83 {strides = array<i32>} : memref<1x128xf32, #tpu.memory_space<vmem>>, vector<1x128xf32>,
    } else {
    }
    %c0_i32_26 = arith.constant 0 : i32
    %66 = arith.cmpi eq, %arg1, %c0_i32_26 : i32
    %67 = arith.extui %66 : i1 to i32
    %c0_i32_27 = arith.constant 0 : i32
    %68 = arith.cmpi ne, %67, %c0_i32_27 : i32
    scf.if %68 {
      %c0_28 = arith.constant 0 : index
      %c0_29 = arith.constant 0 : index
      %69 = vector.load %arg5[%c0_28, %c0_29] : memref<1x128xf32, #tpu.memory_space<vmem>>, vector<1x128xf32>
      %cst_30 = arith.constant dense<0.000000e+00> : vector<128xf32>
      %70 = vector.multi_reduction <add>, %69, %cst_30 [0] : vector<1x128xf32> to vector<128xf32>
      %71 = vector.shape_cast %70 : vector<128xf32> to vector<1x128xf32>
      %c0_31 = arith.constant 0 : index
      %c0_32 = arith.constant 0 : index
      %c0_33 = arith.constant 0 : index
      %c0_34 = arith.constant 0 : index
      %72 = vector.load %arg4[%c0_31, %c0_32, %c0_33, %c0_34] : memref<1x2x1x128xf32, #tpu.memory_space<vmem>>, vector<1x1x1x128xf32>
      %73 = vector.shape_cast %72 : vector<1x1x1x128xf32> to vector<1x128xf32>
      %74 = vector.shape_cast %71 : vector<1x128xf32> to vector<1x1x1x128xf32>
      tpu.vector_store %arg4[%c0_31, %c0_32, %c0_33, %c0_34], %74 {strides = array<i32>} : memref<1x2x1x128xf32, #tpu.memory_space<vmem>>, vector<1x1x1x128xf32>,
      %c0_35 = arith.constant 0 : index
      %c0_36 = arith.constant 0 : index
      %75 = vector.load %arg6[%c0_35, %c0_36] : memref<1x128xf32, #tpu.memory_space<vmem>>, vector<1x128xf32>
      %cst_37 = arith.constant dense<0.000000e+00> : vector<128xf32>
      %76 = vector.multi_reduction <add>, %75, %cst_37 [0] : vector<1x128xf32> to vector<128xf32>
      %77 = vector.shape_cast %76 : vector<128xf32> to vector<1x128xf32>
      %c0_38 = arith.constant 0 : index
      %c1 = arith.constant 1 : index
      %c0_39 = arith.constant 0 : index
      %c0_40 = arith.constant 0 : index
      %78 = vector.load %arg4[%c0_38, %c1, %c0_39, %c0_40] : memref<1x2x1x128xf32, #tpu.memory_space<vmem>>, vector<1x1x1x128xf32>
      %79 = vector.shape_cast %78 : vector<1x1x1x128xf32> to vector<1x128xf32>
      %80 = vector.shape_cast %77 : vector<1x128xf32> to vector<1x1x1x128xf32>
      tpu.vector_store %arg4[%c0_38, %c1, %c0_39, %c0_40], %80 {strides = array<i32>} : memref<1x2x1x128xf32, #tpu.memory_space<vmem>>, vector<1x1x1x128xf32>,
    } else {
    }
    return
  }
  func.func @transform_0(%arg0: i32, %arg1: i32) -> (i32, i32) {
    %c1_i32 = arith.constant 1 : i32
    %0 = arith.muli %arg0, %c1_i32 : i32
    %1 = arith.addi %0, %arg1 : i32
    %c0_i32 = arith.constant 0 : i32
    %2 = arith.minsi %1, %c0_i32 : i32
    %c0_i32_0 = arith.constant 0 : i32
    %c0_i32_1 = arith.constant 0 : i32
    return %2, %c0_i32_0 : i32, i32
  }
  func.func @transform_1(%arg0: i32, %arg1: i32) -> (i32, i32) {
    %c1_i32 = arith.constant 1 : i32
    %0 = arith.muli %arg0, %c1_i32 : i32
    %1 = arith.addi %0, %arg1 : i32
    %c0_i32 = arith.constant 0 : i32
    %2 = arith.minsi %1, %c0_i32 : i32
    %c0_i32_0 = arith.constant 0 : i32
    %c0_i32_1 = arith.constant 0 : i32
    return %2, %c0_i32_0 : i32, i32
  }
  func.func @transform_2(%arg0: i32, %arg1: i32) -> (i32, i32, i32, i32) {
    %c0_i32 = arith.constant 0 : i32
    %c0_i32_0 = arith.constant 0 : i32
    %c0_i32_1 = arith.constant 0 : i32
    %c0_i32_2 = arith.constant 0 : i32
    return %arg0, %c0_i32, %c0_i32_0, %c0_i32_1 : i32, i32, i32, i32
  }
}

</mosaic_0001>

<llo_original>
// kernel: tpu_custom_call.1
$region0: #{tpu_custom_call.1}
  #allocation0 [shape = 'u32[]', space=smem, size = 0x4, offset = 0x4, fixed_abs, tag = 'smem constant byte address 0x4 - core index']
  #allocation1 [shape = 'u32[144,128]{1,0:T(1,128)}', space=vmem, size = 0x12000, scoped, tag = 'internal scratch']
  #allocation2 [shape = 'f32[1,128]{1,0:T(1,128)}', space=vmem, size = 0x200, scoped, tag = 'scratch operand']
  #allocation3 [shape = 'f32[1,128]{1,0:T(1,128)}', space=vmem, size = 0x200, scoped, tag = 'scratch operand']
  %s0 = inlined_call_operand.hbm [shape: f32[1,128], index: 0, kind: input, shape index: {}]
  %s1 = inlined_call_operand.vmem [shape: s8[1,128], index: 1, kind: input, shape index: {}]
  %s2 = inlined_call_operand.hbm [shape: f32[1,2,1,128], index: 2, kind: output, shape index: {}]
  %s3 = sld [smem:[#allocation0]]
  $region38: #{tpu_custom_call.1} parent=0
    _
  %s5 = ssub.s32 1, %s3
  %s6 = scalar_select 0, %s5, %s3
  $region1: #{tpu_custom_call.1} parent=0
    #allocation4 [shape = 'u8[512]{0}', space=vmem, size = 0x400, scoped, tag = 'input window, operand 0, single buffered']
    #allocation5 [shape = 's32[1]{0}', space=sflag, size = 0x4, scoped, tag = 'scoped memory for tpu_custom_call.1']
    #allocation6 [shape = 's32[1]{0}', space=sflag, size = 0x4, scoped, tag = 'scoped memory for tpu_custom_call.1']
    #allocation7 [shape = 'u8[1024]{0}', space=vmem, size = 0x400, scoped, tag = 'output window, operand 0, single buffered']
    %7 = vsyncpa [#allocation5], 0
    %8 = vsyncpa [#allocation6], 0
    // Predicated region
    $region2: #{tpu_custom_call.1} parent=1 // pred_check
      _
    $region3: #{tpu_custom_call.1} parent=1 // pred_check_branch
      %10 = sbr.rel (0) target = $region5
    $region4: #{tpu_custom_call.1} parent=1 // pred_region
      %s11 = sadd.s32 0, 0
      %p12 = scmp.lt.s32.totalorder %s11, 0
      %s13 = scalar_select %p12, %s11, 0
      %s15 = ssub.s32 16, 16
      %16 = vsyncadd [#allocation5], %s15
      %s17 = smul.addr %s13, 16
      %s18 = scalar_lea.hbm %s0, %s17
      %s20 = sshll.u32 [#allocation4], 4
      %s21 = int_to_ptr.vmem [resolvable:$true] %s20
      %23 = dma.hbm_to_vmem [thread:$0]  %s18, 16, %s21, [#allocation5]
    $region5: #{tpu_custom_call.1} parent=1 // pred_fallthru
      _
    // Predicated region
    $region6: #{tpu_custom_call.1} parent=1 // pred_check
      _
    $region7: #{tpu_custom_call.1} parent=1 // pred_check_branch
      %25 = sbr.rel (0) target = $region9
    $region8: #{tpu_custom_call.1} parent=1 // pred_region
      %s26 = sadd.s32 0, 0
      %p27 = scmp.lt.s32.totalorder %s26, 0
      %s28 = scalar_select %p27, %s26, 0
      %p29 = scmp.lt.s32.totalorder %s28, 0
      %s30 = scalar_select %p29, %s28, 0
      %s31 = scalar_lea.vmem %s1, %s30
      %s32 = sadd.s32 0, 0
      %p33 = scmp.lt.s32.totalorder %s32, 0
      %s34 = scalar_select %p33, %s32, 0
    $region9: #{tpu_custom_call.1} parent=1 // pred_fallthru
      _
    // Predicated region
    $region10: #{tpu_custom_call.1} parent=1 // pred_check
      _
    $region11: #{tpu_custom_call.1} parent=1 // pred_check_branch
      %36 = sbr.rel (0) target = $region13
    $region12: #{tpu_custom_call.1} parent=1 // pred_region
      %37 = dma.done [#allocation5], 16
    $region13: #{tpu_custom_call.1} parent=1 // pred_fallthru
      _
    %s38 = sadd.s32 0, 0
    %p39 = scmp.lt.s32.totalorder %s38, 0
    %s40 = scalar_select %p39, %s38, 0
    %p41 = scmp.lt.s32.totalorder %s40, 0
    %s42 = scalar_select %p41, %s40, 0
    %s43 = scalar_lea.vmem %s1, %s42
    %s44 = sadd.s32 0, 0
    %p45 = scmp.lt.s32.totalorder %s44, 0
    %s46 = scalar_select %p45, %s44, 0
    %s47 = sadd.s32 0, 0
    %p48 = scmp.lt.s32.totalorder %s47, 0
    %s49 = scalar_select %p48, %s47, 0
    %p50 = scmp.lt.s32.totalorder %s49, 0
    %s51 = scalar_select %p50, %s49, 0
    %s52 = scalar_lea.vmem %s1, %s51
    %s53 = sadd.s32 0, 0
    %p54 = scmp.lt.s32.totalorder %s53, 0
    %s55 = scalar_select %p54, %s53, 0
    %p58 = scmp.eq.s32.totalorder 0, 0
    // Predicated region
    $region14: #{tpu_custom_call.1} parent=1 // pred_check
      %p59 = pneg %p58
    $region15: #{tpu_custom_call.1} parent=1 // pred_check_branch
      %61 = sbr.rel (%p59) target = $region17
    $region16: #{tpu_custom_call.1} parent=1 // pred_region
      %62 = vst [vmem:[#allocation2] sm:$0x1] 0.0
      %63 = vst [vmem:[#allocation3] sm:$0x1] 0.0
    $region17: #{tpu_custom_call.1} parent=1 // pred_fallthru
      _
    %v64 = vld [vmem:[#allocation4] sm:$0x1]
    %v65 = vlaneseq
    %v66 = vand.u32 %v65, 127
    %v67 = vand.u32 %v66, 3
    %68 = vrot.lane.b32.xlu0 %v66, 1
    %v69 = vpop.permute.xlu0 %68
    %70 = vrot.lane.b32.xlu0 %v66, 2
    %v71 = vpop.permute.xlu0 %70
    %v72 = vxor.u32 %v66, 1
    %vm73 = vcmp.eq.s32.totalorder %v69, %v72
    %v74 = vxor.u32 %v66, 2
    %vm75 = vcmp.eq.s32.totalorder %v71, %v74
    %76 = vrot.lane.b32.xlu0 %v64, 1
    %v77 = vpop.permute.xlu0 %76
    %78 = vrot.lane.b32.xlu0 %v64, 127
    %v79 = vpop.permute.xlu0 %78
    %v80 = vsel %vm73, %v77, %v79
    %v81 = vmax.f32 %v64, %v80
    %82 = vrot.lane.b32.xlu0 %v81, 2
    %v83 = vpop.permute.xlu0 %82
    %84 = vrot.lane.b32.xlu0 %v81, 126
    %v85 = vpop.permute.xlu0 %84
    %v86 = vsel %vm75, %v83, %v85
    %v87 = vmax.f32 %v81, %v86
    %v88 = vsub.f32 %v64, %v87
    %v89 = vmul.f32 %v88, 1.442695
    %v90 = vpow.pop %v89
    %91 = vrot.lane.b32.xlu0 %v90, 1
    %v92 = vpop.permute.xlu0 %91
    %93 = vrot.lane.b32.xlu0 %v90, 127
    %v94 = vpop.permute.xlu0 %93
    %v95 = vsel %vm73, %v92, %v94
    %v96 = vadd.f32 %v90, %v95
    %97 = vrot.lane.b32.xlu0 %v96, 2
    %v98 = vpop.permute.xlu0 %97
    %99 = vrot.lane.b32.xlu0 %v96, 126
    %v100 = vpop.permute.xlu0 %99
    %v101 = vsel %vm75, %v98, %v100
    %v102 = vadd.f32 %v96, %v101
    %v103 = vlog2.pop %v102
    %v104 = vmul.f32 %v103, 0.6931472
    %v105 = vadd.f32 %v104, %v87
    %v106 = vsub.f32 %v105, %v64
    %v107 = vld [vmem:[%s52] sm:$0x1]
    %vm108 = vnez %v107
    %vm109 = vcmp.eq.s32.totalorder %v67, 0
    %vm110 = vcmp.eq.s32.totalorder %v67, 1
    %vm111 = vcmp.eq.s32.totalorder %v67, 2
    %v112 = vsel %vm111, 0.31914893, 0.4787234
    %v113 = vsel %vm110, 0.19148937, %v112
    %v114 = vsel %vm109, 0.010638298, %v113
    %v115 = vsel %vm108, 16843009, 0
    %v116 = vunpack.c.0.s8 %v115
    %vm117 = vcmp.ne.s32.totalorder %v116, 0
    %v118 = vsel %vm117, %v106, 0.0
    %v119 = vsel %vm117, 1, 0
    %v120 = vlaneseq
    %v121 = vshrl.u32 %v120, 7
    %v122 = vsub.s32 0, %v121
    %v123 = vrot.slane %v119, %v122
    %vm124 = vcmp.ne.s32.totalorder %v123, 0
    %v125 = vsel %vm124, %v114, 0.0
    %s126 = sadd.s32 0, 0
    %s127 = sadd.s32 %s126, 1
    %p128 = scmp.gt.s32.totalorder %s127, 1
    %p129 = scmp.le.s32.totalorder %s127, 1
    // Predicated region
    $region18: #{tpu_custom_call.1} parent=1 // pred_check
      %p130 = pneg %p129
    $region19: #{tpu_custom_call.1} parent=1 // pred_check_branch
      %132 = sbr.rel (%p130) target = $region21
    $region20: #{tpu_custom_call.1} parent=1 // pred_region
      %v133 = vld [vmem:[#allocation2] sm:$0x1]
      %v134 = vadd.f32 %v133, %v118
      %135 = vst [vmem:[#allocation2] sm:$0x1] %v134
      %v136 = vld [vmem:[#allocation3] sm:$0x1]
      %v137 = vadd.f32 %v136, %v125
      %138 = vst [vmem:[#allocation3] sm:$0x1] %v137
    $region21: #{tpu_custom_call.1} parent=1 // pred_fallthru
      _
    // Predicated region
    $region22: #{tpu_custom_call.1} parent=1 // pred_check
      %p139 = pneg %p128
    $region23: #{tpu_custom_call.1} parent=1 // pred_check_branch
      %141 = sbr.rel (%p139) target = $region25
    $region24: #{tpu_custom_call.1} parent=1 // pred_region
      %v142 = vlaneseq
      %v143 = vshrl.u32 %v142, 7
      %v144 = vstv %s126
      %v145 = vadd.s32 %v144, %v143
      %vm146 = vcmp.lt.s32.totalorder %v145, 1
      %v147 = vld [vmem:[#allocation2] sm:$0x1]
      %v148 = vsel %vm146, %v118, 0.0
      %v149 = vadd.f32 %v147, %v148
      %150 = vst [vmem:[#allocation2] sm:$0x1] %v149
      %v151 = vld [vmem:[#allocation3] sm:$0x1]
      %v152 = vsel %vm146, %v125, 0.0
      %v153 = vadd.f32 %v151, %v152
      %154 = vst [vmem:[#allocation3] sm:$0x1] %v153
    $region25: #{tpu_custom_call.1} parent=1 // pred_fallthru
      _
    // Predicated region
    $region26: #{tpu_custom_call.1} parent=1 // pred_check
      %p155 = pneg %p58
    $region27: #{tpu_custom_call.1} parent=1 // pred_check_branch
      %157 = sbr.rel (%p155) target = $region29
    $region28: #{tpu_custom_call.1} parent=1 // pred_region
      %v158 = vld [vmem:[#allocation2] sm:$0x1]
      %v159 = vadd.f32 %v158, 0.0
      %160 = vst [vmem:[#allocation7] sm:$0x1] %v159
      %v161 = vld [vmem:[#allocation3] sm:$0x1]
      %v162 = vadd.f32 %v161, 0.0
      %s163 = scalar_lea.vmem [#allocation7], 1
      %164 = vst [vmem:[%s163] sm:$0x1] %v162
    $region29: #{tpu_custom_call.1} parent=1 // pred_fallthru
      _
    // Predicated region
    $region30: #{tpu_custom_call.1} parent=1 // pred_check
      _
    $region31: #{tpu_custom_call.1} parent=1 // pred_check_branch
      %166 = sbr.rel (0) target = $region33
    $region32: #{tpu_custom_call.1} parent=1 // pred_region
      %s168 = ssub.s32 32, 32
      %169 = vsyncadd [#allocation6], %s168
      %s170 = sshll.u32 [#allocation7], 4
      %s171 = int_to_ptr.vmem [resolvable:$true] %s170
      %176 = dma.vmem_to_hbm [thread:$0]  %s171, 32, %s2, [#allocation6], 16, 16, 1
    $region33: #{tpu_custom_call.1} parent=1 // pred_fallthru
      _
    // Predicated region
    $region34: #{tpu_custom_call.1} parent=1 // pred_check
      _
    $region35: #{tpu_custom_call.1} parent=1 // pred_check_branch
      %178 = sbr.rel (0) target = $region37
    $region36: #{tpu_custom_call.1} parent=1 // pred_region
      %179 = dma.done [#allocation6], 32
    $region37: #{tpu_custom_call.1} parent=1 // pred_fallthru
      _
    %180 = vsyncpa [#allocation5], 1
    %181 = vsyncpa [#allocation6], 1

</llo_original>
